<compile_context>
chip_gen: v5e
topology: v5e:2x2
jax: 0.10.0
libtpu: 0.0.40
codegen_flags: <defaults>
</compile_context>

<pallas_src>
import functools

import jax
import jax.numpy as jnp
from jax.experimental import pallas as pl
from jax.experimental.pallas import tpu as pltpu


def _cdiv(a, b):
    return -(-a // b)


def _round_up(a, b):
    return _cdiv(a, b) * b


def _tpu_vmem_and_cores():
    """Returns (per-TensorCore VMEM bytes, TensorCores sharing 'parallel' axes)."""
    cap = 128 * 1024 * 1024
    try:
        cap = int(pltpu.get_tpu_info().vmem_capacity_bytes)
    except Exception:
        pass
    # Heuristic: 64 MiB/TC VMEM => v7x-class chip (2 TensorCores per chip share
    # the 'parallel' grid axes); 128 MiB => v5e/v6e single-TC chips.
    cores = 2 if cap <= 64 * 1024 * 1024 else 1
    return cap, cores


# ----------------------------- kernels --------------------------------------


def _se3d_fused_kernel(x_ref, w1t_ref, w2t_ref, o_ref, *, inv_s):
    # x_ref block: (bt, C, Sp) with the (possibly zero-padded) flattened spatial
    # extent on the lane axis.
    x = x_ref[...]                                                 # native dtype
    # Squeeze: global average pool, f32 accumulation (padded lanes are zeros).
    pooled = jnp.sum(x, axis=-1, dtype=jnp.float32) * inv_s        # (bt, C) f32
    # Excitation: fc1 -> swish -> fc2 -> sigmoid, batched over the tile.
    h = jnp.dot(pooled, w1t_ref[...], preferred_element_type=jnp.float32)
    h = h * jax.nn.sigmoid(h)                                      # Swish
    gate = jax.nn.sigmoid(
        jnp.dot(h, w2t_ref[...], preferred_element_type=jnp.float32))
    # Scale: broadcast the channel gate over the spatial lanes in native dtype.
    o_ref[...] = (x * gate.astype(x.dtype)[:, :, None]).astype(o_ref.dtype)


def _se3d_pool_kernel(x_ref, psum_ref, *, s_chunk, s_total):
    # Grid: (batch, S-chunk). psum block (1, C, 1) is resident across the
    # 'arbitrary' S-chunk axis and accumulates the spatial sum in f32.
    si = pl.program_id(1)

    @pl.when(si == 0)
    def _():
        psum_ref[...] = jnp.zeros_like(psum_ref)

    x = x_ref[...]                                                 # (1, C, sc)
    lane = jax.lax.broadcasted_iota(jnp.int32, x.shape, 2)
    valid = (si * s_chunk + lane) < s_total                        # mask ragged tail
    xm = jnp.where(valid, x, jnp.zeros_like(x))
    psum_ref[...] += jnp.sum(xm, axis=-1, keepdims=True, dtype=jnp.float32)


def _se3d_scale_kernel(x_ref, gate_ref, o_ref):
    # x block (1, C, sc) * gate block (1, C, 1); OOB lane writes are masked.
    o_ref[...] = (x_ref[...] * gate_ref[...]).astype(o_ref.dtype)


# ----------------------------- wrappers --------------------------------------


def _se3d_chunked(x_flat, w1t, w2t, *, S, budget, hard_cap):
    """Two-pass fallback for large C*S (e.g. v7x 64 MiB VMEM): pool then scale."""
    B, C, _ = x_flat.shape
    dt = x_flat.dtype
    itemsize = jnp.dtype(dt).itemsize

    # Lane chunk: largest multiple of 128 whose double-buffered in + out blocks
    # fit the budget (batch tile = 1 in this regime: one batch row is already big).
    sc = (budget // (4 * C * itemsize)) // 128 * 128
    sc = min(max(sc, 128), S)
    n_s = _cdiv(S, sc)

    chunk_live = 4 * C * sc * itemsize + 4 * 1024 * 1024
    vmem_limit = int(min(max(chunk_live, 32 * 1024 * 1024), hard_cap))

    # Pass 1: spatial sums per (batch, channel), accumulated in f32.
    pool_kernel = functools.partial(_se3d_pool_kernel, s_chunk=sc, s_total=S)
    psum = pl.pallas_call(
        pool_kernel,
        out_shape=jax.ShapeDtypeStruct((B, C, 1), jnp.float32),
        grid=(B, n_s),
        in_specs=[pl.BlockSpec((1, C, sc), lambda b, s: (b, 0, s))],
        out_specs=pl.BlockSpec((1, C, 1), lambda b, s: (b, 0, 0)),
        compiler_params=pltpu.CompilerParams(
            dimension_semantics=("parallel", "arbitrary"),
            vmem_limit_bytes=vmem_limit,
        ),
    )(x_flat)

    # Tiny excitation MLP on (B, C): plain XLA — negligible next to the
    # two streaming passes.
    pooled = psum[..., 0] * (1.0 / S)                              # (B, C) f32
    h = pooled @ w1t.astype(jnp.float32)
    h = h * jax.nn.sigmoid(h)
    gate = jax.nn.sigmoid(h @ w2t.astype(jnp.float32))             # (B, C) f32
    gate = gate.astype(dt).reshape(B, C, 1)

    # Pass 2: stream x again and apply the per-channel gate.
    out_flat = pl.pallas_call(
        _se3d_scale_kernel,
        out_shape=jax.ShapeDtypeStruct((B, C, S), dt),
        grid=(B, n_s),
        in_specs=[pl.BlockSpec((1, C, sc), lambda b, s: (b, 0, s)),
                  pl.BlockSpec((1, C, 1), lambda b, s: (b, 0, 0))],
        out_specs=pl.BlockSpec((1, C, sc), lambda b, s: (b, 0, s)),
        compiler_params=pltpu.CompilerParams(
            dimension_semantics=("parallel", "parallel"),
            vmem_limit_bytes=vmem_limit,
        ),
    )(x_flat, gate)
    # TODO(synk): with B == 1 on a 2-TC chip both passes run on one core; an
    # S-parallel pool + cross-core combine would use the second TensorCore.
    return out_flat


def se3d_forward(x, w1, w2, *, vmem_block_budget_bytes=None, donate_input=False):
    """SE3d forward. x: (B, C, D, H, W); w1: (C//r, C); w2: (C, C//r)."""
    B, C, D, H, W = x.shape
    S = D * H * W
    Cr = w1.shape[0]
    dt = x.dtype
    itemsize = jnp.dtype(dt).itemsize

    w1t = jnp.asarray(w1).T        # (C, Cr)
    w2t = jnp.asarray(w2).T        # (Cr, C)
    w_bytes = (w1t.size * jnp.dtype(w1t.dtype).itemsize
               + w2t.size * jnp.dtype(w2t.dtype).itemsize)

    vmem_cap, cores = _tpu_vmem_and_cores()
    if vmem_block_budget_bytes is None:
        budget = int(0.70 * vmem_cap)          # generation-aware block budget
    else:
        budget = int(vmem_block_budget_bytes)
    hard_cap = int(0.75 * vmem_cap)            # never request more scoped VMEM

    x_flat = x.reshape(B, C, S)
    slab = C * S * itemsize                    # one batch row of x (== of out)

    if 4 * slab > budget:
        # Even a single batch slab can't be double-buffered -> chunked fallback.
        out_flat = _se3d_chunked(x_flat, w1t, w2t, S=S, budget=budget,
                                 hard_cap=hard_cap)
        return out_flat.reshape(B, C, D, H, W)

    # ---- fused single-pass path ----
    # Lane-dense stores for small/odd spatial sizes: zero-pad S to a multiple of
    # 128 (zeros don't perturb the mean since we divide by the true S). Large S
    # already stores mostly full 128-lane vregs and the wrapper pad/slice would
    # add whole-tensor HBM copies, so skip padding there.
    pad = (S % 128 != 0) and (S < 512) and (
        4 * C * _round_up(S, 128) * itemsize <= budget)
    Sp = _round_up(S, 128) if pad else S
    if pad:
        x_flat = jnp.pad(x_flat, ((0, 0), (0, 0), (0, Sp - S)))
    slab_p = C * Sp * itemsize

    # Largest batch tile whose double-buffered in + out blocks fit the budget.
    bt = max(1, min(B, budget // (4 * slab_p)))
    # v7x: keep both TensorCores busy — the 'parallel' batch axis is the only
    # thing that shards this mem-bound kernel across cores.
    if cores > 1 and B > 1:
        bt = min(bt, _cdiv(B, cores))
    grid = (_cdiv(B, bt),)   # remainder-tolerant: edge-tile OOB rows are masked

    live = 4 * bt * slab_p + 2 * w_bytes + 2 * 1024 * 1024
    vmem_limit = int(min(max(live, 32 * 1024 * 1024), hard_cap))

    kernel = functools.partial(_se3d_fused_kernel, inv_s=1.0 / S)
    out_flat = pl.pallas_call(
        kernel,
        out_shape=jax.ShapeDtypeStruct((B, C, Sp), dt),
        grid=grid,
        in_specs=[
            pl.BlockSpec((bt, C, Sp), lambda b: (b, 0, 0)),
            pl.BlockSpec((C, Cr), lambda b: (0, 0)),
            pl.BlockSpec((Cr, C), lambda b: (0, 0)),
        ],
        out_specs=pl.BlockSpec((bt, C, Sp), lambda b: (b, 0, 0)),
        compiler_params=pltpu.CompilerParams(
            dimension_semantics=("parallel",),
            vmem_limit_bytes=vmem_limit,
        ),
        # Reuse x's HBM buffer for the output when the caller donates x.
        input_output_aliases=({0: 0} if donate_input else {}),
    )(x_flat, w1t, w2t)

    if pad:
        out_flat = out_flat[:, :, :S]
    return out_flat.reshape(B, C, D, H, W)


def se3d_reference(x, w1, w2):
    pooled = x.mean(axis=(-1, -2, -3))                             # (B, C)
    h = pooled @ w1.T
    h = h * jax.nn.sigmoid(h)
    s = jax.nn.sigmoid(h @ w2.T)                                   # (B, C)
    return x * s[:, :, None, None, None]


if __name__ == "__main__":
    # Module config: channel=32, reduction=8 -> hidden = 4
    B, C, D, H, W = 2, 32, 4, 4, 4
    reduction = 8
    Cr = C // reduction

    key = jax.random.PRNGKey(0)
    kx, k1, k2 = jax.random.split(key, 3)

    x = jax.random.normal(kx, (B, C, D, H, W), dtype=jnp.float32)
    # Deterministic synthetic weights (nn.Linear, bias=False):
    #   fc[0].weight: (C//r, C), fc[2].weight: (C, C//r)
    w1 = jax.random.normal(k1, (Cr, C), dtype=jnp.float32) * (1.0 / C) ** 0.5
    w2 = jax.random.normal(k2, (C, Cr), dtype=jnp.float32) * (1.0 / Cr) ** 0.5

    ref = se3d_reference(x, w1, w2)

    # Fused single-pass path (the normal path).
    out = jax.block_until_ready(se3d_forward(x, w1, w2))
    assert out.shape == ref.shape
    assert jnp.allclose(out, ref, atol=1e-5, rtol=1e-5), "fused path mismatch"

    # Force the S-chunked two-pass fallback (the path very large C*S takes on
    # v7x's 64 MiB VMEM) and verify it as well.
    out_chunked = jax.block_until_ready(
        se3d_forward(x, w1, w2, vmem_block_budget_bytes=16 * 1024))
    assert jnp.allclose(out_chunked, ref, atol=1e-5, rtol=1e-5), \
        "chunked path mismatch"

    print("KERNEL_OK")
</pallas_src>

<mosaic_0001>
module attributes {stable_mosaic.version = 11 : i64} {
  func.func @_se3d_fused_kernel(%arg0: i32, %arg1: memref<2x32x128xf32, #tpu.memory_space<vmem>>, %arg2: memref<32x4xf32, #tpu.memory_space<vmem>>, %arg3: memref<4x32xf32, #tpu.memory_space<vmem>>, %arg4: memref<2x32x128xf32, #tpu.memory_space<vmem>>) attributes {dimension_semantics = [#tpu.dimension_semantics<parallel>], iteration_bounds = array<i64: 1>, scalar_prefetch = 0 : i64, scratch_operands = 0 : i64, tpu.core_type = #tpu.core_type<tc>, window_params = [{transform_indices = @transform_0, window_bounds = array<i64: 2, 32, 128>}, {pipeline_mode = #tpu.pipeline_mode<synchronous>, transform_indices = @transform_1, window_bounds = array<i64: 32, 4>}, {pipeline_mode = #tpu.pipeline_mode<synchronous>, transform_indices = @transform_2, window_bounds = array<i64: 4, 32>}, {transform_indices = @transform_3, window_bounds = array<i64: 2, 32, 128>}]} {
    %c0 = arith.constant 0 : index
    %c0_0 = arith.constant 0 : index
    %c0_1 = arith.constant 0 : index
    %0 = vector.load %arg1[%c0, %c0_0, %c0_1] : memref<2x32x128xf32, #tpu.memory_space<vmem>>, vector<2x32x128xf32>
    %cst = arith.constant dense<0.000000e+00> : vector<2x32xf32>
    %1 = vector.multi_reduction <add>, %0, %cst [2] : vector<2x32x128xf32> to vector<2x32xf32>
    %cst_2 = arith.constant 1.562500e-02 : f32
    %2 = vector.broadcast %cst_2 : f32 to vector<2x32xf32>
    %3 = arith.mulf %1, %2 : vector<2x32xf32>
    %c0_3 = arith.constant 0 : index
    %c0_4 = arith.constant 0 : index
    %4 = vector.load %arg2[%c0_3, %c0_4] : memref<32x4xf32, #tpu.memory_space<vmem>>, vector<32x4xf32>
    %cst_5 = arith.constant dense<0.000000e+00> : vector<2x4xf32>
    %5 = tpu.matmul %3, %4, %cst_5 {dimension_numbers = #tpu.dot_dimension_numbers<[1], [0], [0], [1], [0, 0, 1, 1], [], []>} : vector<2x32xf32>, vector<32x4xf32>, vector<2x4xf32> -> vector<2x4xf32>
    %6 = arith.negf %5 : vector<2x4xf32>
    %7 = math.exp %6 : vector<2x4xf32>
    %cst_6 = arith.constant 1.000000e+00 : f32
    %8 = vector.broadcast %cst_6 : f32 to vector<2x4xf32>
    %9 = arith.addf %8, %7 : vector<2x4xf32>
    %10 = arith.divf %8, %9 : vector<2x4xf32>
    %11 = arith.mulf %5, %10 : vector<2x4xf32>
    %c0_7 = arith.constant 0 : index
    %c0_8 = arith.constant 0 : index
    %12 = vector.load %arg3[%c0_7, %c0_8] : memref<4x32xf32, #tpu.memory_space<vmem>>, vector<4x32xf32>
    %cst_9 = arith.constant dense<0.000000e+00> : vector<2x32xf32>
    %13 = tpu.matmul %11, %12, %cst_9 {dimension_numbers = #tpu.dot_dimension_numbers<[1], [0], [0], [1], [0, 0, 1, 1], [], []>} : vector<2x4xf32>, vector<4x32xf32>, vector<2x32xf32> -> vector<2x32xf32>
    %14 = arith.negf %13 : vector<2x32xf32>
    %15 = math.exp %14 : vector<2x32xf32>
    %cst_10 = arith.constant 1.000000e+00 : f32
    %16 = vector.broadcast %cst_10 : f32 to vector<2x32xf32>
    %17 = arith.addf %16, %15 : vector<2x32xf32>
    %18 = arith.divf %16, %17 : vector<2x32xf32>
    %19 = vector.shape_cast %18 : vector<2x32xf32> to vector<2x32x1xf32>
    %20 = vector.broadcast %19 : vector<2x32x1xf32> to vector<2x32x128xf32>
    %21 = arith.mulf %0, %20 : vector<2x32x128xf32>
    %c0_11 = arith.constant 0 : index
    %c0_12 = arith.constant 0 : index
    %c0_13 = arith.constant 0 : index
    %22 = vector.load %arg4[%c0_11, %c0_12, %c0_13] : memref<2x32x128xf32, #tpu.memory_space<vmem>>, vector<2x32x128xf32>
    tpu.vector_store %arg4[%c0_11, %c0_12, %c0_13], %21 {strides = array<i32>} : memref<2x32x128xf32, #tpu.memory_space<vmem>>, vector<2x32x128xf32>,
    return
  }
  func.func @transform_0(%arg0: i32) -> (i32, i32, i32) {
    %c0_i32 = arith.constant 0 : i32
    %c0_i32_0 = arith.constant 0 : i32
    %c0_i32_1 = arith.constant 0 : i32
    return %arg0, %c0_i32, %c0_i32_0 : i32, i32, i32
  }
  func.func @transform_1(%arg0: i32) -> (i32, i32) {
    %c0_i32 = arith.constant 0 : i32
    %c0_i32_0 = arith.constant 0 : i32
    %c0_i32_1 = arith.constant 0 : i32
    return %c0_i32, %c0_i32_0 : i32, i32
  }
  func.func @transform_2(%arg0: i32) -> (i32, i32) {
    %c0_i32 = arith.constant 0 : i32
    %c0_i32_0 = arith.constant 0 : i32
    %c0_i32_1 = arith.constant 0 : i32
    return %c0_i32, %c0_i32_0 : i32, i32
  }
  func.func @transform_3(%arg0: i32) -> (i32, i32, i32) {
    %c0_i32 = arith.constant 0 : i32
    %c0_i32_0 = arith.constant 0 : i32
    %c0_i32_1 = arith.constant 0 : i32
    return %arg0, %c0_i32, %c0_i32_0 : i32, i32, i32
  }
}

</mosaic_0001>

<llo_original>
// kernel: tpu_custom_call.1
$region0: #{tpu_custom_call.1}
  #allocation0 [shape = 'u32[]', space=smem, size = 0x4, offset = 0x4, fixed_abs, tag = 'smem constant byte address 0x4 - core index']
  #allocation1 [shape = 'u32[72,128]{1,0:T(1,128)}', space=vmem, size = 0x9000, scoped, tag = 'internal scratch']
  %s0 = inlined_call_operand.hbm [shape: f32[2,32,128], index: 0, kind: input, shape index: {}]
  %s1 = inlined_call_operand.vmem [shape: f32[32,4], index: 1, kind: input, shape index: {}]
  %s2 = inlined_call_operand.vmem [shape: f32[4,32], index: 2, kind: input, shape index: {}]
  %s3 = inlined_call_operand.hbm [shape: f32[2,32,128], index: 3, kind: output, shape index: {}]
  %s4 = sld [smem:[#allocation0]]
  $region26: #{tpu_custom_call.1} parent=0
    _
  %s6 = ssub.s32 1, %s4
  %s7 = scalar_select 0, %s6, %s4
  $region1: #{tpu_custom_call.1} parent=0
    #allocation2 [shape = 'u8[32768]{0}', space=vmem, size = 0x8000, scoped, tag = 'input window, operand 0, single buffered']
    #allocation3 [shape = 's32[1]{0}', space=sflag, size = 0x4, scoped, tag = 'scoped memory for tpu_custom_call.1']
    #allocation4 [shape = 's32[1]{0}', space=sflag, size = 0x4, scoped, tag = 'scoped memory for tpu_custom_call.1']
    #allocation5 [shape = 'u8[32768]{0}', space=vmem, size = 0x8000, scoped, tag = 'output window, operand 0, single buffered']
    %8 = vsyncpa [#allocation3], 0
    %9 = vsyncpa [#allocation4], 0
    // Predicated region
    $region2: #{tpu_custom_call.1} parent=1 // pred_check
      _
    $region3: #{tpu_custom_call.1} parent=1 // pred_check_branch
      %11 = sbr.rel (0) target = $region5
    $region4: #{tpu_custom_call.1} parent=1 // pred_region
      %13 = vsyncadd [#allocation3], 0
      %s14 = sshll.u32 %s0, 4
      %s15 = int_to_ptr.hbm [resolvable:$true] %s14
      %s16 = sshll.u32 [#allocation2], 4
      %s17 = int_to_ptr.vmem [resolvable:$true] %s16
      %22 = dma.hbm_to_vmem [thread:$0]  %s15, 1024, %s17, [#allocation3], 128, 128, 8
    $region5: #{tpu_custom_call.1} parent=1 // pred_fallthru
      _
    // Predicated region
    $region6: #{tpu_custom_call.1} parent=1 // pred_check
      _
    $region7: #{tpu_custom_call.1} parent=1 // pred_check_branch
      %24 = sbr.rel (0) target = $region9
    $region8: #{tpu_custom_call.1} parent=1 // pred_region
      _
    $region9: #{tpu_custom_call.1} parent=1 // pred_fallthru
      _
    // Predicated region
    $region10: #{tpu_custom_call.1} parent=1 // pred_check
      _
    $region11: #{tpu_custom_call.1} parent=1 // pred_check_branch
      %26 = sbr.rel (0) target = $region13
    $region12: #{tpu_custom_call.1} parent=1 // pred_region
      _
    $region13: #{tpu_custom_call.1} parent=1 // pred_fallthru
      _
    // Predicated region
    $region14: #{tpu_custom_call.1} parent=1 // pred_check
      _
    $region15: #{tpu_custom_call.1} parent=1 // pred_check_branch
      %28 = sbr.rel (0) target = $region17
    $region16: #{tpu_custom_call.1} parent=1 // pred_region
      %30 = dma.done [#allocation3], 1024
    $region17: #{tpu_custom_call.1} parent=1 // pred_fallthru
      _
    %v31 = vld [vmem:[#allocation2] sm:$0xff]
    %v32 = vld [vmem:[#allocation2 + $0x8] sm:$0xff]
    %v33 = vld [vmem:[#allocation2 + $0x10] sm:$0xff]
    %v34 = vld [vmem:[#allocation2 + $0x18] sm:$0xff]
    %v35 = vld [vmem:[#allocation2 + $0x20] sm:$0xff]
    %v36 = vld [vmem:[#allocation2 + $0x28] sm:$0xff]
    %v37 = vld [vmem:[#allocation2 + $0x30] sm:$0xff]
    %v38 = vld [vmem:[#allocation2 + $0x38] sm:$0xff]
    %39 = vadd.xlane.f32.xlu0 %v31
    %v40 = vpop.xlane.xlu0 %39
    %41 = vadd.xlane.f32.xlu0 %v32
    %v42 = vpop.xlane.xlu0 %41
    %43 = vadd.xlane.f32.xlu0 %v33
    %v44 = vpop.xlane.xlu0 %43
    %45 = vadd.xlane.f32.xlu0 %v34
    %v46 = vpop.xlane.xlu0 %45
    %47 = vadd.xlane.f32.xlu0 %v35
    %v48 = vpop.xlane.xlu0 %47
    %49 = vadd.xlane.f32.xlu0 %v36
    %v50 = vpop.xlane.xlu0 %49
    %51 = vadd.xlane.f32.xlu0 %v37
    %v52 = vpop.xlane.xlu0 %51
    %53 = vadd.xlane.f32.xlu0 %v38
    %v54 = vpop.xlane.xlu0 %53
    %v55 = vmul.f32 %v40, 0.015625
    %v56 = vmul.f32 %v42, 0.015625
    %v57 = vmul.f32 %v44, 0.015625
    %v58 = vmul.f32 %v46, 0.015625
    %v59 = vmul.f32 %v48, 0.015625
    %v60 = vmul.f32 %v50, 0.015625
    %v61 = vmul.f32 %v52, 0.015625
    %v62 = vmul.f32 %v54, 0.015625
    %v63 = vld [vmem:[%s1] sm:$0xff]
    %v64 = vld [vmem:[%s1 + $0x8] sm:$0xff]
    %v65 = vld [vmem:[%s1 + $0x10] sm:$0xff]
    %v66 = vld [vmem:[%s1 + $0x18] sm:$0xff]
    %v75 = vlaneseq
    %v76 = vand.u32 %v75, 127
    %v77 = vperm.slane %v55, %v76
    %v78 = vadd.s32 %v76, 4294967288
    %v79 = vperm.slane %v56, %v78
    %vm80 = vcmask 130112
    %v81 = vsel %vm80, %v79, %v77
    %v82 = vadd.s32 %v76, 4294967280
    %v83 = vperm.slane %v57, %v82
    %vm84 = vcmask 195712
    %v85 = vsel %vm84, %v83, %v81
    %v86 = vadd.s32 %v76, 4294967272
    %v87 = vperm.slane %v58, %v86
    %vm88 = vcmask 261312
    %v89 = vsel %vm88, %v87, %v85
    %v90 = vperm.slane %v59, %v76
    %v91 = vperm.slane %v60, %v78
    %v92 = vsel %vm80, %v91, %v90
    %v93 = vperm.slane %v61, %v82
    %v94 = vsel %vm84, %v93, %v92
    %v95 = vperm.slane %v62, %v86
    %v96 = vsel %vm88, %v95, %v94
    %vm97 = vcmask 1041409
    %v98 = vsel %vm97, %v96, %v89
    %vm99 = vcmask 261120
    %v100 = vsel %vm99, %v98, 0
    %102 = vmatpush.msra.mxu0 0.0
    %103 = vmatpush.msra.mxu0 0.0
    %104 = vmatpush.msra.mxu0 0.0
    %105 = vmatpush.msra.mxu0 0.0
    %106 = vmatpush.msra.mxu0 0.0
    %107 = vmatpush.msra.mxu0 0.0
    %108 = vmatpush.msra.mxu0 0.0
    %109 = vmatpush.msra.mxu0 0.0
    %110 = vmatpush.msra.mxu0 0.0
    %111 = vmatpush.msra.mxu0 0.0
    %112 = vmatpush.msra.mxu0 0.0
    %113 = vmatpush.msra.mxu0 0.0
    %114 = vmatpush.msra.mxu0 %v66
    %115 = vmatpush.msra.mxu0 %v65
    %116 = vmatpush.msra.mxu0 %v64
    %117 = vmatpush.msra.mxu0 %v63
    %118 = vmatmul.f32.gmra.mxu0 %v100
    %v119 = vpop.f32.mrf.mxu0
    %v120 = vadd.f32 0.0, %v119
    %121 = vdwg.mxu0
    %v122 = vxor.u32 %v120, 2147483648
    %v123 = vmul.f32 %v122, 1.442695
    %v124 = vpow.pop %v123
    %v125 = vadd.f32 %v124, 1.0
    %v126 = vrcp.pop %v125
    %v127 = vmul.f32 %v125, %v126
    %v128 = vsub.f32 1.0, %v127
    %v129 = vmul.f32 %v126, %v128
    %v130 = vadd.f32 %v126, %v129
    %vm131 = vweird.f32 %v125
    %vm132 = vweird.f32 %v126
    %vm133 = vmor %vm131, %vm132
    %v134 = vsel %vm133, %v126, %v130
    %v135 = vand.u32 2147483647, %v125
    %vm136 = vcmp.eq.f32.partialorder %v135, 8.507059e+37
    %v137 = vand.u32 %v125, 2147483648
    %v138 = vor.u32 1.1754944e-38, %v137
    %v139 = vsel %vm136, %v138, %v134
    %v140 = vmul.f32 1.0, %v139
    %v141 = vmul.f32 %v120, %v140
    %v142 = vld [vmem:[%s2] sm:$0xf]
    %vm143 = vcmask 31744
    %v145 = vsel %vm143, %v141, 0
    %vm147 = vcmask 1043456
    %v149 = vsel %vm147, %v142, 0
    %151 = vmatpush.msra.mxu0 0.0
    %152 = vmatpush.msra.mxu0 0.0
    %153 = vmatpush.msra.mxu0 0.0
    %154 = vmatpush.msra.mxu0 0.0
    %155 = vmatpush.msra.mxu0 0.0
    %156 = vmatpush.msra.mxu0 0.0
    %157 = vmatpush.msra.mxu0 0.0
    %158 = vmatpush.msra.mxu0 0.0
    %159 = vmatpush.msra.mxu0 0.0
    %160 = vmatpush.msra.mxu0 0.0
    %161 = vmatpush.msra.mxu0 0.0
    %162 = vmatpush.msra.mxu0 0.0
    %163 = vmatpush.msra.mxu0 0.0
    %164 = vmatpush.msra.mxu0 0.0
    %165 = vmatpush.msra.mxu0 0.0
    %166 = vmatpush.msra.mxu0 %v149
    %167 = vmatmul.f32.gmra.mxu0 %v145
    %v168 = vpop.f32.mrf.mxu0
    %v169 = vadd.f32 0.0, %v168
    %170 = vdwg.mxu0
    %v171 = vxor.u32 %v169, 2147483648
    %v172 = vmul.f32 %v171, 1.442695
    %v173 = vpow.pop %v172
    %v174 = vadd.f32 %v173, 1.0
    %v175 = vrcp.pop %v174
    %v176 = vmul.f32 %v174, %v175
    %v177 = vsub.f32 1.0, %v176
    %v178 = vmul.f32 %v175, %v177
    %v179 = vadd.f32 %v175, %v178
    %vm180 = vweird.f32 %v174
    %vm181 = vweird.f32 %v175
    %vm182 = vmor %vm180, %vm181
    %v183 = vsel %vm182, %v175, %v179
    %v184 = vand.u32 2147483647, %v174
    %vm185 = vcmp.eq.f32.partialorder %v184, 8.507059e+37
    %v186 = vand.u32 %v174, 2147483648
    %v187 = vor.u32 1.1754944e-38, %v186
    %v188 = vsel %vm185, %v187, %v183
    %v189 = vmul.f32 1.0, %v188
    %v190 = vperm.slane %v189, 0
    %v191 = vlaneseq
    %v192 = vshrl.u32 %v191, 7
    %194 = vset.pattern.permute.xlu0 %v192
    %195 = vperm.xlu0 %194, %v190
    %v196 = vpop.permute.xlu0 %195
    %v197 = vlaneseq
    %v198 = vshrl.u32 %v197, 7
    %v199 = vadd.s32 %v198, 8
    %200 = vset.pattern.permute.xlu0 %v199
    %201 = vperm.xlu0 %200, %v190
    %v202 = vpop.permute.xlu0 %201
    %v203 = vlaneseq
    %v204 = vshrl.u32 %v203, 7
    %v205 = vadd.s32 %v204, 16
    %206 = vset.pattern.permute.xlu0 %v205
    %207 = vperm.xlu0 %206, %v190
    %v208 = vpop.permute.xlu0 %207
    %v209 = vlaneseq
    %v210 = vshrl.u32 %v209, 7
    %v211 = vadd.s32 %v210, 24
    %212 = vset.pattern.permute.xlu0 %v211
    %213 = vperm.xlu0 %212, %v190
    %v214 = vpop.permute.xlu0 %213
    %v215 = vperm.slane %v189, 1
    %v216 = vlaneseq
    %v217 = vshrl.u32 %v216, 7
    %219 = vset.pattern.permute.xlu0 %v217
    %220 = vperm.xlu0 %219, %v215
    %v221 = vpop.permute.xlu0 %220
    %v222 = vlaneseq
    %v223 = vshrl.u32 %v222, 7
    %v224 = vadd.s32 %v223, 8
    %225 = vset.pattern.permute.xlu0 %v224
    %226 = vperm.xlu0 %225, %v215
    %v227 = vpop.permute.xlu0 %226
    %v228 = vlaneseq
    %v229 = vshrl.u32 %v228, 7
    %v230 = vadd.s32 %v229, 16
    %231 = vset.pattern.permute.xlu0 %v230
    %232 = vperm.xlu0 %231, %v215
    %v233 = vpop.permute.xlu0 %232
    %v234 = vlaneseq
    %v235 = vshrl.u32 %v234, 7
    %v236 = vadd.s32 %v235, 24
    %237 = vset.pattern.permute.xlu0 %v236
    %238 = vperm.xlu0 %237, %v215
    %v239 = vpop.permute.xlu0 %238
    %v240 = vmul.f32 %v31, %v196
    %v241 = vmul.f32 %v32, %v202
    %v242 = vmul.f32 %v33, %v208
    %v243 = vmul.f32 %v34, %v214
    %v244 = vmul.f32 %v35, %v221
    %v245 = vmul.f32 %v36, %v227
    %v246 = vmul.f32 %v37, %v233
    %v247 = vmul.f32 %v38, %v239
    %248 = vst [vmem:[#allocation5] sm:$0xff] %v240
    %249 = vst [vmem:[#allocation5 + $0x8] sm:$0xff] %v241
    %250 = vst [vmem:[#allocation5 + $0x10] sm:$0xff] %v242
    %251 = vst [vmem:[#allocation5 + $0x18] sm:$0xff] %v243
    %252 = vst [vmem:[#allocation5 + $0x20] sm:$0xff] %v244
    %253 = vst [vmem:[#allocation5 + $0x28] sm:$0xff] %v245
    %254 = vst [vmem:[#allocation5 + $0x30] sm:$0xff] %v246
    %255 = vst [vmem:[#allocation5 + $0x38] sm:$0xff] %v247
    // Predicated region
    $region18: #{tpu_custom_call.1} parent=1 // pred_check
      _
    $region19: #{tpu_custom_call.1} parent=1 // pred_check_branch
      %257 = sbr.rel (0) target = $region21
    $region20: #{tpu_custom_call.1} parent=1 // pred_region
      %259 = vsyncadd [#allocation4], 0
      %s260 = sshll.u32 [#allocation5], 4
      %s261 = int_to_ptr.vmem [resolvable:$true] %s260
      %s262 = sshll.u32 %s3, 4
      %s263 = int_to_ptr.hbm [resolvable:$true] %s262
      %268 = dma.vmem_to_hbm [thread:$0]  %s261, 1024, %s263, [#allocation4], 128, 128, 8
    $region21: #{tpu_custom_call.1} parent=1 // pred_fallthru
      _
    // Predicated region
    $region22: #{tpu_custom_call.1} parent=1 // pred_check
      _
    $region23: #{tpu_custom_call.1} parent=1 // pred_check_branch
      %270 = sbr.rel (0) target = $region25
    $region24: #{tpu_custom_call.1} parent=1 // pred_region
      %272 = dma.done [#allocation4], 1024
    $region25: #{tpu_custom_call.1} parent=1 // pred_fallthru
      _
    %273 = vsyncpa [#allocation3], 1
    %274 = vsyncpa [#allocation4], 1

</llo_original>
